<compile_context>
chip_gen: v5e
topology: v5e:2x2
jax: 0.10.0
libtpu: 0.0.40
codegen_flags: <defaults>
</compile_context>

<pallas_src>
import math

import jax
import jax.numpy as jnp
from jax.experimental import pallas as pl
from jax.experimental.pallas import tpu as pltpu

_LANE = 128
_SUBLANE = 8
_VMEM_BUDGET_BYTES = 12 * 1024 * 1024   # target pipelined footprint per step
_VMEM_LIMIT_BYTES = 32 * 1024 * 1024    # scoped VMEM limit we request


def _round_up(x, m):
    return -(-x // m) * m


def _round_down(x, m):
    return (x // m) * m


def _add_pe_kernel(x_ref, pe_ref, o_ref):
    # Elementwise streaming add; pe broadcasts over the size-1 batch axis in
    # the 3-D path (cheap sublane broadcast) and is pre-tiled in the 2-D path.
    o_ref[...] = (x_ref[...] + pe_ref[...]).astype(o_ref.dtype)


def _choose_seq_tile(s, bytes_per_seq_row, row_align):
    """Largest seq tile fitting the VMEM budget; prefers >= 2 grid steps."""
    rows = max(row_align, _VMEM_BUDGET_BYTES // max(1, bytes_per_seq_row))
    rows = _round_down(rows, row_align)
    if rows < s:
        return rows
    # Whole seq fits in a single block: still split in two (pipelining, and
    # dual-TC sharding on v7x) when the alignment constraint allows it.
    if s >= 2 * row_align:
        return _round_up(-(-s // 2), row_align)
    return s


def make_positional_encoding_table(emb_size, max_len=512):
    """Replicates the PyTorch buffer: pe of shape (max_len, 1, emb_size)."""
    position = jnp.arange(max_len, dtype=jnp.float32)[:, None]          # (max_len, 1)
    div_term = jnp.exp(
        jnp.arange(0, emb_size, 2, dtype=jnp.float32)
        * (-math.log(10000.0) / emb_size))                              # (ceil(e/2),)
    pe = jnp.zeros((max_len, emb_size), dtype=jnp.float32)
    pe = pe.at[:, 0::2].set(jnp.sin(position * div_term))
    pe = pe.at[:, 1::2].set(jnp.cos(position * div_term)[:, : emb_size // 2])
    # unsqueeze(0).transpose(0, 1) -> (max_len, 1, emb)
    return pe[:, None, :]


def positional_encoding(x, pe, *, min_pallas_bytes=0):
    """x: (seq, batch, emb).  pe: (max_len, 1, emb) float32 buffer."""
    s, b, e = x.shape
    dtype = x.dtype
    itemsize = jnp.dtype(dtype).itemsize
    pe_s = pe[:s].astype(dtype)             # matches self.pe[:x.size(0), :]

    if x.size * itemsize < min_pallas_bytes:
        # Toy sizes: fixed pallas_call overhead dwarfs the work; let XLA fuse.
        return x + pe_s

    compiler_params = pltpu.CompilerParams(
        dimension_semantics=("parallel",),
        vmem_limit_bytes=_VMEM_LIMIT_BYTES)

    if e < _LANE:
        # Lane-dense path: merge (batch, emb) into the last dim and pre-tile
        # pe over batch (pe traffic grows to |x| -- acceptable only for e<128).
        lanes = b * e
        lanes_pad = _round_up(lanes, _LANE)
        bytes_per_row = 2 * 3 * lanes_pad * itemsize      # dbl-buffer * (x, out, pe)
        seq_tile = min(s, _choose_seq_tile(s, bytes_per_row, _SUBLANE))
        grid = (pl.cdiv(s, seq_tile),)

        x2 = x.reshape(s, lanes)
        pe2 = jnp.broadcast_to(pe_s, (s, b, e)).reshape(s, lanes)

        out2 = pl.pallas_call(
            _add_pe_kernel,
            out_shape=jax.ShapeDtypeStruct((s, lanes), dtype),
            grid=grid,
            in_specs=[pl.BlockSpec((seq_tile, lanes), lambda i: (i, 0)),
                      pl.BlockSpec((seq_tile, lanes), lambda i: (i, 0))],
            out_specs=pl.BlockSpec((seq_tile, lanes), lambda i: (i, 0)),
            compiler_params=compiler_params,
            input_output_aliases={0: 0},
        )(x2, pe2)
        return out2.reshape(s, b, e)

    # emb >= 128: keep (seq, batch, emb); pe stays (seq, 1, emb) and is
    # broadcast over the batch (sublane) axis inside the kernel, so pe HBM
    # traffic is 1/batch of x's.
    b_pad = _round_up(b, _SUBLANE)
    e_pad = _round_up(e, _LANE)
    bytes_per_row = 2 * (2 * b_pad + _SUBLANE) * e_pad * itemsize
    seq_tile = min(s, _choose_seq_tile(s, bytes_per_row, 1))
    grid = (pl.cdiv(s, seq_tile),)

    return pl.pallas_call(
        _add_pe_kernel,
        out_shape=jax.ShapeDtypeStruct((s, b, e), dtype),
        grid=grid,
        in_specs=[pl.BlockSpec((seq_tile, b, e), lambda i: (i, 0, 0)),
                  pl.BlockSpec((seq_tile, 1, e), lambda i: (i, 0, 0))],
        out_specs=pl.BlockSpec((seq_tile, b, e), lambda i: (i, 0, 0)),
        compiler_params=compiler_params,
        input_output_aliases={0: 0},
    )(x, pe_s)


def positional_encoding_ref(x, pe):
    """Pure-JAX reference mirroring the PyTorch forward (eval mode)."""
    return x + pe[: x.shape[0]].astype(x.dtype)


if __name__ == "__main__":
    max_len = 512
    key = jax.random.PRNGKey(0)
    k1, k2, k3 = jax.random.split(key, 3)

    # Case 1: module-sized small input, emb < 128 -> merged lane-dense path.
    s1, b1, e1 = 8, 2, 32
    pe1 = make_positional_encoding_table(e1, max_len=max_len)
    x1 = jax.random.normal(k1, (s1, b1, e1), dtype=jnp.float32)
    out1 = jax.block_until_ready(positional_encoding(x1, pe1))
    ref1 = positional_encoding_ref(x1, pe1)
    assert out1.shape == (s1, b1, e1)
    assert jnp.allclose(out1, ref1, atol=1e-6, rtol=1e-6), "case 1 mismatch"

    # Case 2: emb >= 128 -> (seq, batch, emb) path with a multi-step grid.
    s2, b2, e2 = 256, 4, 256
    pe2 = make_positional_encoding_table(e2, max_len=max_len)
    x2 = jax.random.normal(k2, (s2, b2, e2), dtype=jnp.float32)
    out2 = jax.block_until_ready(positional_encoding(x2, pe2))
    ref2 = positional_encoding_ref(x2, pe2)
    assert jnp.allclose(out2, ref2, atol=1e-6, rtol=1e-6), "case 2 mismatch"

    # Case 3: bf16 activations exercise the pe cast + explicit store cast.
    x3 = jax.random.normal(k3, (s1, b1, e1), dtype=jnp.float32).astype(jnp.bfloat16)
    out3 = jax.block_until_ready(positional_encoding(x3, pe1))
    ref3 = positional_encoding_ref(x3, pe1)
    assert jnp.allclose(out3.astype(jnp.float32), ref3.astype(jnp.float32),
                        atol=1e-2, rtol=1e-2), "case 3 mismatch"

    # Case 4: tiny-input gate bypasses Pallas and matches the reference.
    out4 = positional_encoding(x1, pe1, min_pallas_bytes=1 << 20)
    assert jnp.allclose(out4, ref1, atol=1e-6, rtol=1e-6), "case 4 mismatch"

    print("KERNEL_OK")
</pallas_src>

<mosaic_0001>
module attributes {stable_mosaic.version = 11 : i64} {
  func.func @_add_pe_kernel(%arg0: i32, %arg1: memref<8x64xf32, #tpu.memory_space<vmem>>, %arg2: memref<8x64xf32, #tpu.memory_space<vmem>>, %arg3: memref<8x64xf32, #tpu.memory_space<vmem>>) attributes {dimension_semantics = [#tpu.dimension_semantics<parallel>], iteration_bounds = array<i64: 1>, scalar_prefetch = 0 : i64, scratch_operands = 0 : i64, tpu.core_type = #tpu.core_type<tc>, window_params = [{transform_indices = @transform_0, window_bounds = array<i64: 8, 64>}, {transform_indices = @transform_1, window_bounds = array<i64: 8, 64>}, {transform_indices = @transform_2, window_bounds = array<i64: 8, 64>}]} {
    %c0 = arith.constant 0 : index
    %c0_0 = arith.constant 0 : index
    %0 = vector.load %arg1[%c0, %c0_0] : memref<8x64xf32, #tpu.memory_space<vmem>>, vector<8x64xf32>
    %c0_1 = arith.constant 0 : index
    %c0_2 = arith.constant 0 : index
    %1 = vector.load %arg2[%c0_1, %c0_2] : memref<8x64xf32, #tpu.memory_space<vmem>>, vector<8x64xf32>
    %2 = arith.addf %0, %1 : vector<8x64xf32>
    %c0_3 = arith.constant 0 : index
    %c0_4 = arith.constant 0 : index
    %3 = vector.load %arg3[%c0_3, %c0_4] : memref<8x64xf32, #tpu.memory_space<vmem>>, vector<8x64xf32>
    tpu.vector_store %arg3[%c0_3, %c0_4], %2 {strides = array<i32>} : memref<8x64xf32, #tpu.memory_space<vmem>>, vector<8x64xf32>,
    return
  }
  func.func @transform_0(%arg0: i32) -> (i32, i32) {
    %c0_i32 = arith.constant 0 : i32
    %c0_i32_0 = arith.constant 0 : i32
    return %arg0, %c0_i32 : i32, i32
  }
  func.func @transform_1(%arg0: i32) -> (i32, i32) {
    %c0_i32 = arith.constant 0 : i32
    %c0_i32_0 = arith.constant 0 : i32
    return %arg0, %c0_i32 : i32, i32
  }
  func.func @transform_2(%arg0: i32) -> (i32, i32) {
    %c0_i32 = arith.constant 0 : i32
    %c0_i32_0 = arith.constant 0 : i32
    return %arg0, %c0_i32 : i32, i32
  }
}

</mosaic_0001>

<llo_original>
// kernel: tpu_custom_call.1
$region0: #{tpu_custom_call.1}
  #allocation0 [shape = 'u32[]', space=smem, size = 0x4, offset = 0x4, fixed_abs, tag = 'smem constant byte address 0x4 - core index']
  #allocation1 [shape = 'u32[72,128]{1,0:T(1,128)}', space=vmem, size = 0x9000, scoped, tag = 'internal scratch']
  %s0 = inlined_call_operand.hbm [shape: f32[8,64], index: 0, kind: input, shape index: {}, may-alias: {0,2}]
  %s1 = inlined_call_operand.vmem [shape: f32[8,64], index: 1, kind: input, shape index: {}]
  %s2 = inlined_call_operand.hbm [shape: f32[8,64], index: 2, kind: output, shape index: {}, may-alias: {0,2}]
  %s3 = sld [smem:[#allocation0]]
  $region22: #{tpu_custom_call.1} parent=0
    _
  %s5 = ssub.s32 1, %s3
  %s6 = scalar_select 0, %s5, %s3
  $region1: #{tpu_custom_call.1} parent=0
    #allocation2 [shape = 'u8[4096]{0}', space=vmem, size = 0x1000, scoped, tag = 'input window, operand 0, single buffered']
    #allocation3 [shape = 's32[1]{0}', space=sflag, size = 0x4, scoped, tag = 'scoped memory for tpu_custom_call.1']
    #allocation4 [shape = 's32[1]{0}', space=sflag, size = 0x4, scoped, tag = 'scoped memory for tpu_custom_call.1']
    #allocation5 [shape = 'u8[4096]{0}', space=vmem, size = 0x1000, scoped, tag = 'output window, operand 0, single buffered']
    %7 = vsyncpa [#allocation3], 0
    %8 = vsyncpa [#allocation4], 0
    // Predicated region
    $region2: #{tpu_custom_call.1} parent=1 // pred_check
      _
    $region3: #{tpu_custom_call.1} parent=1 // pred_check_branch
      %10 = sbr.rel (0) target = $region5
    $region4: #{tpu_custom_call.1} parent=1 // pred_region
      %12 = vsyncadd [#allocation3], 0
      %s14 = sshll.u32 %s0, 4
      %s15 = int_to_ptr.hbm [resolvable:$true] %s14
      %s16 = sshll.u32 [#allocation2], 4
      %s17 = int_to_ptr.vmem [resolvable:$true] %s16
      %19 = dma.hbm_to_vmem [thread:$0]  %s15, 128, %s17, [#allocation3]
    $region5: #{tpu_custom_call.1} parent=1 // pred_fallthru
      _
    // Predicated region
    $region6: #{tpu_custom_call.1} parent=1 // pred_check
      _
    $region7: #{tpu_custom_call.1} parent=1 // pred_check_branch
      %21 = sbr.rel (0) target = $region9
    $region8: #{tpu_custom_call.1} parent=1 // pred_region
      _
    $region9: #{tpu_custom_call.1} parent=1 // pred_fallthru
      _
    // Predicated region
    $region10: #{tpu_custom_call.1} parent=1 // pred_check
      _
    $region11: #{tpu_custom_call.1} parent=1 // pred_check_branch
      %23 = sbr.rel (0) target = $region13
    $region12: #{tpu_custom_call.1} parent=1 // pred_region
      %25 = dma.done [#allocation3], 128
    $region13: #{tpu_custom_call.1} parent=1 // pred_fallthru
      _
    %v26 = vld [vmem:[#allocation2] sm:$0xff]
    %v27 = vld [vmem:[%s1] sm:$0xff]
    %v28 = vadd.f32 %v26, %v27
    %vm29 = vcmask 523264
    %30 = vst.msk [vmem:[#allocation5] sm:$0xff] %vm29, %v28
    // Predicated region
    $region14: #{tpu_custom_call.1} parent=1 // pred_check
      _
    $region15: #{tpu_custom_call.1} parent=1 // pred_check_branch
      %32 = sbr.rel (0) target = $region17
    $region16: #{tpu_custom_call.1} parent=1 // pred_region
      %34 = vsyncadd [#allocation4], 0
      %s36 = sshll.u32 [#allocation5], 4
      %s37 = int_to_ptr.vmem [resolvable:$true] %s36
      %s38 = sshll.u32 %s2, 4
      %s39 = int_to_ptr.hbm [resolvable:$true] %s38
      %41 = dma.vmem_to_hbm [thread:$0]  %s37, 128, %s39, [#allocation4]
    $region17: #{tpu_custom_call.1} parent=1 // pred_fallthru
      _
    // Predicated region
    $region18: #{tpu_custom_call.1} parent=1 // pred_check
      _
    $region19: #{tpu_custom_call.1} parent=1 // pred_check_branch
      %43 = sbr.rel (0) target = $region21
    $region20: #{tpu_custom_call.1} parent=1 // pred_region
      %45 = dma.done [#allocation4], 128
    $region21: #{tpu_custom_call.1} parent=1 // pred_fallthru
      _
    %46 = vsyncpa [#allocation3], 1
    %47 = vsyncpa [#allocation4], 1

</llo_original>
